<compile_context>
chip_gen: v6e
topology: v6e:2x2x1
jax: 0.10.0
libtpu: 0.0.40
codegen_flags: <defaults>
</compile_context>

<pallas_src>
import jax
import jax.numpy as jnp
from jax.experimental import pallas as pl
from jax.experimental.pallas import tpu as pltpu


def _qk_edge_bert_kernel(
    # --- embeddings (bf16) ---
    qk_ref,        # [tb, H]       query/key pair embedding
    nodes_ref,     # [2, tb, H]    (qself, kself)
    nbrs_ref,      # [12, tb, H]   (qk1..3, kq1..3, qq1..3, kk1..3)
    # --- EdgeBertBlock weights ---
    w1q_ref,       # [H, E] bf16   node half of linear_layer
    w1k_ref,       # [H, E] bf16   neighbor half of linear_layer
    b1_ref,        # [1, E] f32
    w2_ref,        # [E, E] bf16   hidden_layer
    b2_ref,        # [1, E] f32
    # --- fused output head (0.2*ori + 0.8*edgebert folded host-side) ---
    wqk_ref,       # [H, L] bf16
    wqks_ref, wkqs_ref, wqqs_ref, wkks_ref,   # [E, L] bf16
    bias_ref,      # [1, L] f32
    # --- output ---
    logits_ref,    # [tb, L] f32
):
    f32 = jnp.float32
    bf16 = jnp.bfloat16
    TB, H = qk_ref.shape
    E = w2_ref.shape[0]

    # ---- node projections (qself, kself), each computed ONCE, bias folded in.
    nodes = nodes_ref[...].reshape(2 * TB, H)
    node_proj = jnp.dot(nodes, w1q_ref[...], preferred_element_type=f32) + b1_ref[...]
    node_proj = node_proj.reshape(2, TB, E)
    # edge-block groups g = (qks, kqs, qqs, kks) use nodes (qself, kself, qself, kself)
    node4 = jnp.concatenate([node_proj, node_proj], axis=0)         # [4, TB, E]

    # ---- all 12 neighbor projections as one long-M matmul (Wk stays resident).
    nbrs = nbrs_ref[...].reshape(12 * TB, H)
    nbr_proj = jnp.dot(nbrs, w1k_ref[...], preferred_element_type=f32)
    nbr_proj = nbr_proj.reshape(4, 3, TB, E)

    # EdgeBertBlock: relu(cat([node, nbr]) @ W1 + b1), mean over the 3 edges.
    edge = jnp.maximum(nbr_proj + node4[:, None, :, :], 0.0)        # [4, 3, TB, E]
    mean = edge.sum(axis=1) * (1.0 / 3.0)                           # [4, TB, E]

    # ---- hidden_layer for all 4 blocks as one [4*TB, E] matmul, then relu.
    hidden_in = mean.reshape(4 * TB, E).astype(bf16)
    hidden = jnp.maximum(
        jnp.dot(hidden_in, w2_ref[...], preferred_element_type=f32) + b2_ref[...],
        0.0,
    )                                                               # [4*TB, E] f32

    qks = hidden[0 * TB:1 * TB].astype(bf16)
    kqs = hidden[1 * TB:2 * TB].astype(bf16)
    qqs = hidden[2 * TB:3 * TB].astype(bf16)
    kks = hidden[3 * TB:4 * TB].astype(bf16)

    # ---- fused head: logits = 0.2*(qk@Wori + bori) + 0.8*(cat(...)@Wedge)
    # with the blend pre-folded into the weights/bias host-side.
    logits = jnp.dot(qk_ref[...], wqk_ref[...], preferred_element_type=f32)
    logits = logits + jnp.dot(qks, wqks_ref[...], preferred_element_type=f32)
    logits = logits + jnp.dot(kqs, wkqs_ref[...], preferred_element_type=f32)
    logits = logits + jnp.dot(qqs, wqqs_ref[...], preferred_element_type=f32)
    logits = logits + jnp.dot(kks, wkks_ref[...], preferred_element_type=f32)
    logits_ref[...] = logits + bias_ref[...]


def model_qk_edge_bert_forward(embs, params, *, tb=None):
    """embs: list of 15 arrays [B, H] in order
       (qk, qself, kself, qk1..3, kq1..3, kk1..3, qq1..3)."""
    B, H = embs[0].shape
    E = params["w2"].shape[0]
    L = params["bori"].shape[-1]
    f32, bf16 = jnp.float32, jnp.bfloat16

    # ---- consolidate the embedding streams (3 inputs instead of 15), bf16.
    qk = embs[0].astype(bf16)                                        # [B, H]
    nodes = jnp.stack([embs[1], embs[2]], axis=0).astype(bf16)       # [2, B, H]
    # neighbor order matches node4 group order (qks, kqs, qqs, kks):
    nbr_idx = [3, 4, 5, 6, 7, 8, 12, 13, 14, 9, 10, 11]
    nbrs = jnp.stack([embs[i] for i in nbr_idx], axis=0).astype(bf16)  # [12, B, H]

    # ---- one-time host-side weight prep: fold output_layer_ori + comb blend.
    w_qk = (0.2 * params["wori"] + 0.8 * params["wedge_qk"]).astype(bf16)   # [H, L]
    w_qks = (0.8 * params["wedge_qks"]).astype(bf16)                        # [E, L]
    w_kqs = (0.8 * params["wedge_kqs"]).astype(bf16)
    w_qqs = (0.8 * params["wedge_qqs"]).astype(bf16)
    w_kks = (0.8 * params["wedge_kks"]).astype(bf16)
    bias = (0.2 * params["bori"]).astype(f32)                               # [1, L]

    w1q = params["w1q"].astype(bf16)
    w1k = params["w1k"].astype(bf16)
    w2 = params["w2"].astype(bf16)
    b1 = params["b1"].astype(f32)
    b2 = params["b2"].astype(f32)

    # ---- tile selection: multiple of 8, capped for v7x VMEM, >=2 grid points
    # when the batch allows so both TensorCores are used.
    if tb is None:
        tb = min(256, max(8, pl.cdiv(B, 2)))
        tb = max(8, (tb // 8) * 8)
    grid = (pl.cdiv(B, tb),)

    def cspec(x):  # grid-invariant weights / biases
        return pl.BlockSpec(x.shape, lambda i, _nd=x.ndim: (0,) * _nd)

    in_specs = [
        pl.BlockSpec((tb, H), lambda i: (i, 0)),           # qk
        pl.BlockSpec((2, tb, H), lambda i: (0, i, 0)),     # nodes
        pl.BlockSpec((12, tb, H), lambda i: (0, i, 0)),    # neighbors
        cspec(w1q), cspec(w1k), cspec(b1), cspec(w2), cspec(b2),
        cspec(w_qk), cspec(w_qks), cspec(w_kqs), cspec(w_qqs), cspec(w_kks),
        cspec(bias),
    ]

    return pl.pallas_call(
        _qk_edge_bert_kernel,
        out_shape=jax.ShapeDtypeStruct((B, L), f32),
        grid_spec=pltpu.PrefetchScalarGridSpec(
            num_scalar_prefetch=0,
            grid=grid,
            in_specs=in_specs,
            out_specs=pl.BlockSpec((tb, L), lambda i: (i, 0)),
        ),
        compiler_params=pltpu.CompilerParams(
            dimension_semantics=("parallel",),
            vmem_limit_bytes=64 * 1024 * 1024,
        ),
    )(qk, nodes, nbrs, w1q, w1k, b1, w2, b2,
      w_qk, w_qks, w_kqs, w_qqs, w_kks, bias)


# ---------------- reference (pure JAX f32, mirrors the torch module) ----------------
def _reference_forward(embs, params):
    qk = embs[0]
    qself, kself = embs[1], embs[2]
    qk1, qk2, qk3 = embs[3], embs[4], embs[5]
    kq1, kq2, kq3 = embs[6], embs[7], embs[8]
    kk1, kk2, kk3 = embs[9], embs[10], embs[11]
    qq1, qq2, qq3 = embs[12], embs[13], embs[14]

    W1 = jnp.concatenate([params["w1q"], params["w1k"]], axis=0)  # [2H, E]

    def edge_bert_block(q, n1, n2, n3):
        node = jnp.repeat(q[:, None, :], 3, axis=1)               # [B,3,H]
        nbr = jnp.stack([n1, n2, n3], axis=1)                     # [B,3,H]
        edge = jnp.concatenate([node, nbr], axis=-1)              # [B,3,2H]
        net = jax.nn.relu(edge @ W1 + params["b1"])
        net = jnp.mean(net, axis=-2)
        return jax.nn.relu(net @ params["w2"] + params["b2"])

    qks = edge_bert_block(qself, qk1, qk2, qk3)
    kqs = edge_bert_block(kself, kq1, kq2, kq3)
    qqs = edge_bert_block(qself, qq1, qq2, qq3)
    kks = edge_bert_block(kself, kk1, kk2, kk3)

    ori = qk @ params["wori"] + params["bori"]
    full = jnp.concatenate([qk, qks, kqs, qqs, kks], axis=-1)
    wedge = jnp.concatenate([params["wedge_qk"], params["wedge_qks"],
                             params["wedge_kqs"], params["wedge_qqs"],
                             params["wedge_kks"]], axis=0)
    new = full @ wedge
    return 0.2 * ori + 0.8 * new


def _xavier_uniform(key, shape):
    fan_out, fan_in = shape[0], shape[1]
    bound = (6.0 / (fan_in + fan_out)) ** 0.5
    return jax.random.uniform(key, shape, jnp.float32, -bound, bound)


if __name__ == "__main__":
    B, H, E, L = 8, 32, 32, 2     # batch, bert_hidden, edgebert_hidden, num_labels
    key = jax.random.PRNGKey(0)
    k_emb, k_w1, k_b1, k_w2, k_b2, k_wo, k_bo, k_we = jax.random.split(key, 8)

    # 15 pooled BERT embeddings: qk + 14 neighbor outputs (use_kkqq=True, use_qk=True)
    emb_keys = jax.random.split(k_emb, 15)
    embs = [jax.random.normal(emb_keys[i], (B, H), jnp.float32) for i in range(15)]

    # EdgeBertBlock parameters (xavier_uniform as in weights_init)
    W1 = _xavier_uniform(k_w1, (E, 2 * H))        # torch layout [out, in]
    W1_T = W1.T                                   # [2H, E]
    W2 = _xavier_uniform(k_w2, (E, E)).T          # [E, E]
    b1 = 0.02 * jax.random.normal(k_b1, (1, E), jnp.float32)
    b2 = 0.02 * jax.random.normal(k_b2, (1, E), jnp.float32)

    # output heads
    Wori = (0.02 * jax.random.normal(k_wo, (L, H), jnp.float32)).T     # [H, L]
    bori = 0.02 * jax.random.normal(k_bo, (1, L), jnp.float32)
    Wedge = (0.02 * jax.random.normal(k_we, (L, H + 4 * E), jnp.float32)).T  # [H+4E, L]

    params = {
        "w1q": W1_T[:H],            # [H, E]
        "w1k": W1_T[H:],            # [H, E]
        "b1": b1,
        "w2": W2,
        "b2": b2,
        "wori": Wori,
        "bori": bori,
        "wedge_qk": Wedge[:H],                  # [H, L]
        "wedge_qks": Wedge[H:H + E],            # [E, L]
        "wedge_kqs": Wedge[H + E:H + 2 * E],    # [E, L]
        "wedge_qqs": Wedge[H + 2 * E:H + 3 * E],
        "wedge_kks": Wedge[H + 3 * E:],
    }

    logits = model_qk_edge_bert_forward(embs, params)
    logits = jax.block_until_ready(logits)

    ref = _reference_forward(embs, params)
    assert logits.shape == (B, L)
    # bf16 inputs / f32 accumulation: loosened tolerance vs the f32 reference.
    assert jnp.allclose(logits, ref, atol=3e-2, rtol=3e-2), "mismatch vs reference"

    print("KERNEL_OK")
</pallas_src>

<mosaic_0001>
module attributes {stable_mosaic.version = 11 : i64} {
  func.func @_qk_edge_bert_kernel(%arg0: i32, %arg1: memref<8x32xbf16, #tpu.memory_space<vmem>>, %arg2: memref<2x8x32xbf16, #tpu.memory_space<vmem>>, %arg3: memref<12x8x32xbf16, #tpu.memory_space<vmem>>, %arg4: memref<32x32xbf16, #tpu.memory_space<vmem>>, %arg5: memref<32x32xbf16, #tpu.memory_space<vmem>>, %arg6: memref<1x32xf32, #tpu.memory_space<vmem>>, %arg7: memref<32x32xbf16, #tpu.memory_space<vmem>>, %arg8: memref<1x32xf32, #tpu.memory_space<vmem>>, %arg9: memref<32x2xbf16, #tpu.memory_space<vmem>>, %arg10: memref<32x2xbf16, #tpu.memory_space<vmem>>, %arg11: memref<32x2xbf16, #tpu.memory_space<vmem>>, %arg12: memref<32x2xbf16, #tpu.memory_space<vmem>>, %arg13: memref<32x2xbf16, #tpu.memory_space<vmem>>, %arg14: memref<1x2xf32, #tpu.memory_space<vmem>>, %arg15: memref<8x2xf32, #tpu.memory_space<vmem>>) attributes {dimension_semantics = [#tpu.dimension_semantics<parallel>], iteration_bounds = array<i64: 1>, scalar_prefetch = 0 : i64, scratch_operands = 0 : i64, tpu.core_type = #tpu.core_type<tc>, window_params = [{transform_indices = @transform_0, window_bounds = array<i64: 8, 32>}, {transform_indices = @transform_1, window_bounds = array<i64: 2, 8, 32>}, {transform_indices = @transform_2, window_bounds = array<i64: 12, 8, 32>}, {pipeline_mode = #tpu.pipeline_mode<synchronous>, transform_indices = @transform_3, window_bounds = array<i64: 32, 32>}, {pipeline_mode = #tpu.pipeline_mode<synchronous>, transform_indices = @transform_4, window_bounds = array<i64: 32, 32>}, {pipeline_mode = #tpu.pipeline_mode<synchronous>, transform_indices = @transform_5, window_bounds = array<i64: 1, 32>}, {pipeline_mode = #tpu.pipeline_mode<synchronous>, transform_indices = @transform_6, window_bounds = array<i64: 32, 32>}, {pipeline_mode = #tpu.pipeline_mode<synchronous>, transform_indices = @transform_7, window_bounds = array<i64: 1, 32>}, {pipeline_mode = #tpu.pipeline_mode<synchronous>, transform_indices = @transform_8, window_bounds = array<i64: 32, 2>}, {pipeline_mode = #tpu.pipeline_mode<synchronous>, transform_indices = @transform_9, window_bounds = array<i64: 32, 2>}, {pipeline_mode = #tpu.pipeline_mode<synchronous>, transform_indices = @transform_10, window_bounds = array<i64: 32, 2>}, {pipeline_mode = #tpu.pipeline_mode<synchronous>, transform_indices = @transform_11, window_bounds = array<i64: 32, 2>}, {pipeline_mode = #tpu.pipeline_mode<synchronous>, transform_indices = @transform_12, window_bounds = array<i64: 32, 2>}, {pipeline_mode = #tpu.pipeline_mode<synchronous>, transform_indices = @transform_13, window_bounds = array<i64: 1, 2>}, {transform_indices = @transform_14, window_bounds = array<i64: 8, 2>}]} {
    %c0 = arith.constant 0 : index
    %c0_0 = arith.constant 0 : index
    %c0_1 = arith.constant 0 : index
    %0 = vector.load %arg2[%c0, %c0_0, %c0_1] : memref<2x8x32xbf16, #tpu.memory_space<vmem>>, vector<2x8x32xbf16>
    %1 = vector.shape_cast %0 : vector<2x8x32xbf16> to vector<16x32xbf16>
    %c0_2 = arith.constant 0 : index
    %c0_3 = arith.constant 0 : index
    %2 = vector.load %arg4[%c0_2, %c0_3] : memref<32x32xbf16, #tpu.memory_space<vmem>>, vector<32x32xbf16>
    %cst = arith.constant dense<0.000000e+00> : vector<16x32xf32>
    %3 = tpu.matmul %1, %2, %cst {dimension_numbers = #tpu.dot_dimension_numbers<[1], [0], [0], [1], [0, 0, 1, 1], [], []>} : vector<16x32xbf16>, vector<32x32xbf16>, vector<16x32xf32> -> vector<16x32xf32>
    %c0_4 = arith.constant 0 : index
    %c0_5 = arith.constant 0 : index
    %4 = vector.load %arg6[%c0_4, %c0_5] : memref<1x32xf32, #tpu.memory_space<vmem>>, vector<1x32xf32>
    %5 = vector.broadcast %4 : vector<1x32xf32> to vector<16x32xf32>
    %6 = arith.addf %3, %5 : vector<16x32xf32>
    %7 = vector.shape_cast %6 : vector<16x32xf32> to vector<2x8x32xf32>
    %8 = tpu.concatenate %7, %7 in 0 : vector<2x8x32xf32>, vector<2x8x32xf32> -> vector<4x8x32xf32>
    %c0_6 = arith.constant 0 : index
    %c0_7 = arith.constant 0 : index
    %c0_8 = arith.constant 0 : index
    %9 = vector.load %arg3[%c0_6, %c0_7, %c0_8] : memref<12x8x32xbf16, #tpu.memory_space<vmem>>, vector<12x8x32xbf16>
    %10 = vector.shape_cast %9 : vector<12x8x32xbf16> to vector<96x32xbf16>
    %c0_9 = arith.constant 0 : index
    %c0_10 = arith.constant 0 : index
    %11 = vector.load %arg5[%c0_9, %c0_10] : memref<32x32xbf16, #tpu.memory_space<vmem>>, vector<32x32xbf16>
    %cst_11 = arith.constant dense<0.000000e+00> : vector<96x32xf32>
    %12 = tpu.matmul %10, %11, %cst_11 {dimension_numbers = #tpu.dot_dimension_numbers<[1], [0], [0], [1], [0, 0, 1, 1], [], []>} : vector<96x32xbf16>, vector<32x32xbf16>, vector<96x32xf32> -> vector<96x32xf32>
    %13 = vector.shape_cast %12 : vector<96x32xf32> to vector<4x3x8x32xf32>
    %14 = vector.shape_cast %8 : vector<4x8x32xf32> to vector<4x1x8x32xf32>
    %15 = vector.broadcast %14 : vector<4x1x8x32xf32> to vector<4x3x8x32xf32>
    %16 = arith.addf %13, %15 : vector<4x3x8x32xf32>
    %cst_12 = arith.constant 0.000000e+00 : f32
    %17 = vector.broadcast %cst_12 : f32 to vector<4x3x8x32xf32>
    %18 = arith.maximumf %16, %17 : vector<4x3x8x32xf32>
    %cst_13 = arith.constant dense<0.000000e+00> : vector<4x8x32xf32>
    %19 = vector.multi_reduction <add>, %18, %cst_13 [1] : vector<4x3x8x32xf32> to vector<4x8x32xf32>
    %cst_14 = arith.constant 0.333333343 : f32
    %20 = vector.broadcast %cst_14 : f32 to vector<4x8x32xf32>
    %21 = arith.mulf %19, %20 : vector<4x8x32xf32>
    %22 = vector.shape_cast %21 : vector<4x8x32xf32> to vector<32x32xf32>
    %23 = arith.truncf %22 : vector<32x32xf32> to vector<32x32xbf16>
    %c0_15 = arith.constant 0 : index
    %c0_16 = arith.constant 0 : index
    %24 = vector.load %arg7[%c0_15, %c0_16] : memref<32x32xbf16, #tpu.memory_space<vmem>>, vector<32x32xbf16>
    %cst_17 = arith.constant dense<0.000000e+00> : vector<32x32xf32>
    %25 = tpu.matmul %23, %24, %cst_17 {dimension_numbers = #tpu.dot_dimension_numbers<[1], [0], [0], [1], [0, 0, 1, 1], [], []>} : vector<32x32xbf16>, vector<32x32xbf16>, vector<32x32xf32> -> vector<32x32xf32>
    %c0_18 = arith.constant 0 : index
    %c0_19 = arith.constant 0 : index
    %26 = vector.load %arg8[%c0_18, %c0_19] : memref<1x32xf32, #tpu.memory_space<vmem>>, vector<1x32xf32>
    %27 = vector.broadcast %26 : vector<1x32xf32> to vector<32x32xf32>
    %28 = arith.addf %25, %27 : vector<32x32xf32>
    %cst_20 = arith.constant 0.000000e+00 : f32
    %29 = vector.broadcast %cst_20 : f32 to vector<32x32xf32>
    %30 = arith.maximumf %28, %29 : vector<32x32xf32>
    %31 = vector.extract_strided_slice %30 {offsets = [0, 0], sizes = [8, 32], strides = [1, 1]} : vector<32x32xf32> to vector<8x32xf32>
    %32 = arith.truncf %31 : vector<8x32xf32> to vector<8x32xbf16>
    %33 = vector.extract_strided_slice %30 {offsets = [8, 0], sizes = [8, 32], strides = [1, 1]} : vector<32x32xf32> to vector<8x32xf32>
    %34 = arith.truncf %33 : vector<8x32xf32> to vector<8x32xbf16>
    %35 = vector.extract_strided_slice %30 {offsets = [16, 0], sizes = [8, 32], strides = [1, 1]} : vector<32x32xf32> to vector<8x32xf32>
    %36 = arith.truncf %35 : vector<8x32xf32> to vector<8x32xbf16>
    %37 = vector.extract_strided_slice %30 {offsets = [24, 0], sizes = [8, 32], strides = [1, 1]} : vector<32x32xf32> to vector<8x32xf32>
    %38 = arith.truncf %37 : vector<8x32xf32> to vector<8x32xbf16>
    %c0_21 = arith.constant 0 : index
    %c0_22 = arith.constant 0 : index
    %39 = vector.load %arg1[%c0_21, %c0_22] : memref<8x32xbf16, #tpu.memory_space<vmem>>, vector<8x32xbf16>
    %c0_23 = arith.constant 0 : index
    %c0_24 = arith.constant 0 : index
    %40 = vector.load %arg9[%c0_23, %c0_24] : memref<32x2xbf16, #tpu.memory_space<vmem>>, vector<32x2xbf16>
    %cst_25 = arith.constant dense<0.000000e+00> : vector<8x2xf32>
    %41 = tpu.matmul %39, %40, %cst_25 {dimension_numbers = #tpu.dot_dimension_numbers<[1], [0], [0], [1], [0, 0, 1, 1], [], []>} : vector<8x32xbf16>, vector<32x2xbf16>, vector<8x2xf32> -> vector<8x2xf32>
    %c0_26 = arith.constant 0 : index
    %c0_27 = arith.constant 0 : index
    %42 = vector.load %arg10[%c0_26, %c0_27] : memref<32x2xbf16, #tpu.memory_space<vmem>>, vector<32x2xbf16>
    %cst_28 = arith.constant dense<0.000000e+00> : vector<8x2xf32>
    %43 = tpu.matmul %32, %42, %cst_28 {dimension_numbers = #tpu.dot_dimension_numbers<[1], [0], [0], [1], [0, 0, 1, 1], [], []>} : vector<8x32xbf16>, vector<32x2xbf16>, vector<8x2xf32> -> vector<8x2xf32>
    %44 = arith.addf %41, %43 : vector<8x2xf32>
    %c0_29 = arith.constant 0 : index
    %c0_30 = arith.constant 0 : index
    %45 = vector.load %arg11[%c0_29, %c0_30] : memref<32x2xbf16, #tpu.memory_space<vmem>>, vector<32x2xbf16>
    %cst_31 = arith.constant dense<0.000000e+00> : vector<8x2xf32>
    %46 = tpu.matmul %34, %45, %cst_31 {dimension_numbers = #tpu.dot_dimension_numbers<[1], [0], [0], [1], [0, 0, 1, 1], [], []>} : vector<8x32xbf16>, vector<32x2xbf16>, vector<8x2xf32> -> vector<8x2xf32>
    %47 = arith.addf %44, %46 : vector<8x2xf32>
    %c0_32 = arith.constant 0 : index
    %c0_33 = arith.constant 0 : index
    %48 = vector.load %arg12[%c0_32, %c0_33] : memref<32x2xbf16, #tpu.memory_space<vmem>>, vector<32x2xbf16>
    %cst_34 = arith.constant dense<0.000000e+00> : vector<8x2xf32>
    %49 = tpu.matmul %36, %48, %cst_34 {dimension_numbers = #tpu.dot_dimension_numbers<[1], [0], [0], [1], [0, 0, 1, 1], [], []>} : vector<8x32xbf16>, vector<32x2xbf16>, vector<8x2xf32> -> vector<8x2xf32>
    %50 = arith.addf %47, %49 : vector<8x2xf32>
    %c0_35 = arith.constant 0 : index
    %c0_36 = arith.constant 0 : index
    %51 = vector.load %arg13[%c0_35, %c0_36] : memref<32x2xbf16, #tpu.memory_space<vmem>>, vector<32x2xbf16>
    %cst_37 = arith.constant dense<0.000000e+00> : vector<8x2xf32>
    %52 = tpu.matmul %38, %51, %cst_37 {dimension_numbers = #tpu.dot_dimension_numbers<[1], [0], [0], [1], [0, 0, 1, 1], [], []>} : vector<8x32xbf16>, vector<32x2xbf16>, vector<8x2xf32> -> vector<8x2xf32>
    %53 = arith.addf %50, %52 : vector<8x2xf32>
    %c0_38 = arith.constant 0 : index
    %c0_39 = arith.constant 0 : index
    %54 = vector.load %arg14[%c0_38, %c0_39] : memref<1x2xf32, #tpu.memory_space<vmem>>, vector<1x2xf32>
    %55 = vector.broadcast %54 : vector<1x2xf32> to vector<8x2xf32>
    %56 = arith.addf %53, %55 : vector<8x2xf32>
    %c0_40 = arith.constant 0 : index
    %c0_41 = arith.constant 0 : index
    %57 = vector.load %arg15[%c0_40, %c0_41] : memref<8x2xf32, #tpu.memory_space<vmem>>, vector<8x2xf32>
    tpu.vector_store %arg15[%c0_40, %c0_41], %56 {strides = array<i32>} : memref<8x2xf32, #tpu.memory_space<vmem>>, vector<8x2xf32>,
    return
  }
  func.func @transform_0(%arg0: i32) -> (i32, i32) {
    %c0_i32 = arith.constant 0 : i32
    %c0_i32_0 = arith.constant 0 : i32
    return %arg0, %c0_i32 : i32, i32
  }
  func.func @transform_1(%arg0: i32) -> (i32, i32, i32) {
    %c0_i32 = arith.constant 0 : i32
    %c0_i32_0 = arith.constant 0 : i32
    %c0_i32_1 = arith.constant 0 : i32
    return %c0_i32, %arg0, %c0_i32_0 : i32, i32, i32
  }
  func.func @transform_2(%arg0: i32) -> (i32, i32, i32) {
    %c0_i32 = arith.constant 0 : i32
    %c0_i32_0 = arith.constant 0 : i32
    %c0_i32_1 = arith.constant 0 : i32
    return %c0_i32, %arg0, %c0_i32_0 : i32, i32, i32
  }
  func.func @transform_3(%arg0: i32) -> (i32, i32) {
    %c0_i32 = arith.constant 0 : i32
    %c0_i32_0 = arith.constant 0 : i32
    %c0_i32_1 = arith.constant 0 : i32
    return %c0_i32, %c0_i32_0 : i32, i32
  }
  func.func @transform_4(%arg0: i32) -> (i32, i32) {
    %c0_i32 = arith.constant 0 : i32
    %c0_i32_0 = arith.constant 0 : i32
    %c0_i32_1 = arith.constant 0 : i32
    return %c0_i32, %c0_i32_0 : i32, i32
  }
  func.func @transform_5(%arg0: i32) -> (i32, i32) {
    %c0_i32 = arith.constant 0 : i32
    %c0_i32_0 = arith.constant 0 : i32
    %c0_i32_1 = arith.constant 0 : i32
    return %c0_i32, %c0_i32_0 : i32, i32
  }
  func.func @transform_6(%arg0: i32) -> (i32, i32) {
    %c0_i32 = arith.constant 0 : i32
    %c0_i32_0 = arith.constant 0 : i32
    %c0_i32_1 = arith.constant 0 : i32
    return %c0_i32, %c0_i32_0 : i32, i32
  }
  func.func @transform_7(%arg0: i32) -> (i32, i32) {
    %c0_i32 = arith.constant 0 : i32
    %c0_i32_0 = arith.constant 0 : i32
    %c0_i32_1 = arith.constant 0 : i32
    return %c0_i32, %c0_i32_0 : i32, i32
  }
  func.func @transform_8(%arg0: i32) -> (i32, i32) {
    %c0_i32 = arith.constant 0 : i32
    %c0_i32_0 = arith.constant 0 : i32
    %c0_i32_1 = arith.constant 0 : i32
    return %c0_i32, %c0_i32_0 : i32, i32
  }
  func.func @transform_9(%arg0: i32) -> (i32, i32) {
    %c0_i32 = arith.constant 0 : i32
    %c0_i32_0 = arith.constant 0 : i32
    %c0_i32_1 = arith.constant 0 : i32
    return %c0_i32, %c0_i32_0 : i32, i32
  }
  func.func @transform_10(%arg0: i32) -> (i32, i32) {
    %c0_i32 = arith.constant 0 : i32
    %c0_i32_0 = arith.constant 0 : i32
    %c0_i32_1 = arith.constant 0 : i32
    return %c0_i32, %c0_i32_0 : i32, i32
  }
  func.func @transform_11(%arg0: i32) -> (i32, i32) {
    %c0_i32 = arith.constant 0 : i32
    %c0_i32_0 = arith.constant 0 : i32
    %c0_i32_1 = arith.constant 0 : i32
    return %c0_i32, %c0_i32_0 : i32, i32
  }
  func.func @transform_12(%arg0: i32) -> (i32, i32) {
    %c0_i32 = arith.constant 0 : i32
    %c0_i32_0 = arith.constant 0 : i32
    %c0_i32_1 = arith.constant 0 : i32
    return %c0_i32, %c0_i32_0 : i32, i32
  }
  func.func @transform_13(%arg0: i32) -> (i32, i32) {
    %c0_i32 = arith.constant 0 : i32
    %c0_i32_0 = arith.constant 0 : i32
    %c0_i32_1 = arith.constant 0 : i32
    return %c0_i32, %c0_i32_0 : i32, i32
  }
  func.func @transform_14(%arg0: i32) -> (i32, i32) {
    %c0_i32 = arith.constant 0 : i32
    %c0_i32_0 = arith.constant 0 : i32
    return %arg0, %c0_i32 : i32, i32
  }
}

</mosaic_0001>

<llo_original>
// kernel: tpu_custom_call.1
$region0: #{tpu_custom_call.1}
  #allocation0 [shape = 'u32[]', space=smem, size = 0x4, offset = 0x4, fixed_abs, tag = 'smem constant byte address 0x4 - core index']
  #allocation1 [shape = 'u32[144,128]{1,0:T(1,128)}', space=vmem, size = 0x12000, scoped, tag = 'internal scratch']
  %s0 = inlined_call_operand.hbm [shape: bf16[8,32], index: 0, kind: input, shape index: {}]
  %s1 = inlined_call_operand.vmem [shape: bf16[2,8,32], index: 1, kind: input, shape index: {}]
  %s2 = inlined_call_operand.vmem [shape: bf16[12,8,32], index: 2, kind: input, shape index: {}]
  %s3 = inlined_call_operand.vmem [shape: bf16[32,32], index: 3, kind: input, shape index: {}]
  %s4 = inlined_call_operand.vmem [shape: bf16[32,32], index: 4, kind: input, shape index: {}]
  %s5 = inlined_call_operand.vmem [shape: f32[1,32], index: 5, kind: input, shape index: {}]
  %s6 = inlined_call_operand.hbm [shape: bf16[32,32], index: 6, kind: input, shape index: {}]
  %s7 = inlined_call_operand.vmem [shape: f32[1,32], index: 7, kind: input, shape index: {}]
  %s8 = inlined_call_operand.vmem [shape: bf16[32,2], index: 8, kind: input, shape index: {}]
  %s9 = inlined_call_operand.vmem [shape: bf16[32,2], index: 9, kind: input, shape index: {}]
  %s10 = inlined_call_operand.vmem [shape: bf16[32,2], index: 10, kind: input, shape index: {}]
  %s11 = inlined_call_operand.vmem [shape: bf16[32,2], index: 11, kind: input, shape index: {}]
  %s12 = inlined_call_operand.vmem [shape: bf16[32,2], index: 12, kind: input, shape index: {}]
  %s13 = inlined_call_operand.vmem [shape: f32[1,2], index: 13, kind: input, shape index: {}]
  %s14 = inlined_call_operand.vmem [shape: f32[8,2], index: 14, kind: output, shape index: {}]
  %s15 = sld [smem:[#allocation0]]
  $region74: #{tpu_custom_call.1} parent=0
    _
  %s17 = ssub.s32 1, %s15
  %s18 = scalar_select 0, %s17, %s15
  $region1: #{tpu_custom_call.1} parent=0
    #allocation2 [shape = 'u8[2048]{0}', space=vmem, size = 0x800, scoped, tag = 'input window, operand 0, single buffered']
    #allocation3 [shape = 's32[1]{0}', space=sflag, size = 0x4, scoped, tag = 'scoped memory for tpu_custom_call.1']
    #allocation4 [shape = 'u8[8192]{0}', space=vmem, size = 0x2000, scoped, tag = 'input window, operand 6, single buffered']
    #allocation5 [shape = 's32[1]{0}', space=sflag, size = 0x4, scoped, tag = 'scoped memory for tpu_custom_call.1']
    %19 = vsyncpa [#allocation3], 0
    %20 = vsyncpa [#allocation5], 0
    // Predicated region
    $region2: #{tpu_custom_call.1} parent=1 // pred_check
      _
    $region3: #{tpu_custom_call.1} parent=1 // pred_check_branch
      %22 = sbr.rel (0) target = $region5
    $region4: #{tpu_custom_call.1} parent=1 // pred_region
      %s24 = ssub.s32 64, 64
      %25 = vsyncadd [#allocation3], %s24
      %s27 = sshll.u32 [#allocation2], 4
      %s28 = int_to_ptr.vmem [resolvable:$true] %s27
      %30 = dma.hbm_to_vmem [thread:$0]  %s0, 64, %s28, [#allocation3]
    $region5: #{tpu_custom_call.1} parent=1 // pred_fallthru
      _
    // Predicated region
    $region6: #{tpu_custom_call.1} parent=1 // pred_check
      _
    $region7: #{tpu_custom_call.1} parent=1 // pred_check_branch
      %32 = sbr.rel (0) target = $region9
    $region8: #{tpu_custom_call.1} parent=1 // pred_region
      _
    $region9: #{tpu_custom_call.1} parent=1 // pred_fallthru
      _
    // Predicated region
    $region10: #{tpu_custom_call.1} parent=1 // pred_check
      _
    $region11: #{tpu_custom_call.1} parent=1 // pred_check_branch
      %34 = sbr.rel (0) target = $region13
    $region12: #{tpu_custom_call.1} parent=1 // pred_region
      _
    $region13: #{tpu_custom_call.1} parent=1 // pred_fallthru
      _
    // Predicated region
    $region14: #{tpu_custom_call.1} parent=1 // pred_check
      _
    $region15: #{tpu_custom_call.1} parent=1 // pred_check_branch
      %36 = sbr.rel (0) target = $region17
    $region16: #{tpu_custom_call.1} parent=1 // pred_region
      _
    $region17: #{tpu_custom_call.1} parent=1 // pred_fallthru
      _
    // Predicated region
    $region18: #{tpu_custom_call.1} parent=1 // pred_check
      _
    $region19: #{tpu_custom_call.1} parent=1 // pred_check_branch
      %38 = sbr.rel (0) target = $region21
    $region20: #{tpu_custom_call.1} parent=1 // pred_region
      _
    $region21: #{tpu_custom_call.1} parent=1 // pred_fallthru
      _
    // Predicated region
    $region22: #{tpu_custom_call.1} parent=1 // pred_check
      _
    $region23: #{tpu_custom_call.1} parent=1 // pred_check_branch
      %40 = sbr.rel (0) target = $region25
    $region24: #{tpu_custom_call.1} parent=1 // pred_region
      _
    $region25: #{tpu_custom_call.1} parent=1 // pred_fallthru
      _
    // Predicated region
    $region26: #{tpu_custom_call.1} parent=1 // pred_check
      _
    $region27: #{tpu_custom_call.1} parent=1 // pred_check_branch
      %42 = sbr.rel (0) target = $region29
    $region28: #{tpu_custom_call.1} parent=1 // pred_region
      %s44 = ssub.s32 256, 256
      %45 = vsyncadd [#allocation5], %s44
      %s46 = sshll.u32 [#allocation4], 4
      %s47 = int_to_ptr.vmem [resolvable:$true] %s46
      %52 = dma.hbm_to_vmem [thread:$0]  %s6, 256, %s47, [#allocation5], 64, 64, 4
    $region29: #{tpu_custom_call.1} parent=1 // pred_fallthru
      _
    // Predicated region
    $region30: #{tpu_custom_call.1} parent=1 // pred_check
      _
    $region31: #{tpu_custom_call.1} parent=1 // pred_check_branch
      %54 = sbr.rel (0) target = $region33
    $region32: #{tpu_custom_call.1} parent=1 // pred_region
      _
    $region33: #{tpu_custom_call.1} parent=1 // pred_fallthru
      _
    // Predicated region
    $region34: #{tpu_custom_call.1} parent=1 // pred_check
      _
    $region35: #{tpu_custom_call.1} parent=1 // pred_check_branch
      %56 = sbr.rel (0) target = $region37
    $region36: #{tpu_custom_call.1} parent=1 // pred_region
      _
    $region37: #{tpu_custom_call.1} parent=1 // pred_fallthru
      _
    // Predicated region
    $region38: #{tpu_custom_call.1} parent=1 // pred_check
      _
    $region39: #{tpu_custom_call.1} parent=1 // pred_check_branch
      %58 = sbr.rel (0) target = $region41
    $region40: #{tpu_custom_call.1} parent=1 // pred_region
      _
    $region41: #{tpu_custom_call.1} parent=1 // pred_fallthru
      _
    // Predicated region
    $region42: #{tpu_custom_call.1} parent=1 // pred_check
      _
    $region43: #{tpu_custom_call.1} parent=1 // pred_check_branch
      %60 = sbr.rel (0) target = $region45
    $region44: #{tpu_custom_call.1} parent=1 // pred_region
      _
    $region45: #{tpu_custom_call.1} parent=1 // pred_fallthru
      _
    // Predicated region
    $region46: #{tpu_custom_call.1} parent=1 // pred_check
      _
    $region47: #{tpu_custom_call.1} parent=1 // pred_check_branch
      %62 = sbr.rel (0) target = $region49
    $region48: #{tpu_custom_call.1} parent=1 // pred_region
      _
    $region49: #{tpu_custom_call.1} parent=1 // pred_fallthru
      _
    // Predicated region
    $region50: #{tpu_custom_call.1} parent=1 // pred_check
      _
    $region51: #{tpu_custom_call.1} parent=1 // pred_check_branch
      %64 = sbr.rel (0) target = $region53
    $region52: #{tpu_custom_call.1} parent=1 // pred_region
      _
    $region53: #{tpu_custom_call.1} parent=1 // pred_fallthru
      _
    // Predicated region
    $region54: #{tpu_custom_call.1} parent=1 // pred_check
      _
    $region55: #{tpu_custom_call.1} parent=1 // pred_check_branch
      %66 = sbr.rel (0) target = $region57
    $region56: #{tpu_custom_call.1} parent=1 // pred_region
      _
    $region57: #{tpu_custom_call.1} parent=1 // pred_fallthru
      _
    // Predicated region
    $region58: #{tpu_custom_call.1} parent=1 // pred_check
      _
    $region59: #{tpu_custom_call.1} parent=1 // pred_check_branch
      %68 = sbr.rel (0) target = $region61
    $region60: #{tpu_custom_call.1} parent=1 // pred_region
      %69 = dma.done [#allocation3], 64
    $region61: #{tpu_custom_call.1} parent=1 // pred_fallthru
      _
    // Predicated region
    $region62: #{tpu_custom_call.1} parent=1 // pred_check
      _
    $region63: #{tpu_custom_call.1} parent=1 // pred_check_branch
      %71 = sbr.rel (0) target = $region65
    $region64: #{tpu_custom_call.1} parent=1 // pred_region
      %72 = dma.done [#allocation5], 256
    $region65: #{tpu_custom_call.1} parent=1 // pred_fallthru
      _
    %v74 = vld [vmem:[%s1] sm:$0xf]
    %v75 = vld [vmem:[%s1 + $0x4] sm:$0xf]
    %v76 = vld [vmem:[%s3] sm:$0xf]
    %v77 = vld [vmem:[%s3 + $0x4] sm:$0xf]
    %v78 = vld [vmem:[%s3 + $0x8] sm:$0xf]
    %v79 = vld [vmem:[%s3 + $0xc] sm:$0xf]
    %v80 = vld [vmem:[%s5] sm:$0x1]
    %v82 = vlaneseq
    %v83 = vshrl.u32 %v82, 7
    %v84 = vsub.s32 0, %v83
    %v85 = vrot.slane %v80, %v84
    %v89 = vunpack.c.l.b16 %v74
    %v90 = vunpack.c.l.b16 %v75
    %v91 = vpack.c.b16 %v90, %v89
    %v96 = vunpack.c.l.b16 %v76
    %v97 = vunpack.c.l.b16 %v77
    %v98 = vunpack.c.l.b16 %v78
    %v99 = vunpack.c.l.b16 %v79
    %v100 = vpack.c.b16 %v97, %v96
    %v101 = vpack.c.b16 %v99, %v98
    %vm104 = vcmask 261120
    %v106 = vsel %vm104, %v91, 0
    %108 = vmatprep.subr.bf16.mxu0 0
    %109 = vmatpush1.bf16.msra.mxu0 0
    %110 = vmatprep.subr.bf16.mxu0 0
    %111 = vmatpush1.bf16.msra.mxu0 0
    %112 = vmatprep.subr.bf16.mxu0 0
    %113 = vmatpush1.bf16.msra.mxu0 0
    %114 = vmatprep.subr.bf16.mxu0 0
    %115 = vmatpush1.bf16.msra.mxu0 0
    %116 = vmatprep.subr.bf16.mxu0 0
    %117 = vmatpush1.bf16.msra.mxu0 0
    %118 = vmatprep.subr.bf16.mxu0 0
    %119 = vmatpush1.bf16.msra.mxu0 0
    %120 = vmatprep.subr.bf16.mxu0 0
    %121 = vmatpush1.bf16.msra.mxu0 %v101
    %122 = vmatprep.subr.bf16.mxu0 0
    %123 = vmatpush1.bf16.msra.mxu0 %v100
    %124 = vmatprep.subr.bf16.mxu0 0
    %125 = vmatpush2.bf16.msra.mxu0 0
    %126 = vmatprep.subr.bf16.mxu0 0
    %127 = vmatpush2.bf16.msra.mxu0 0
    %128 = vmatprep.subr.bf16.mxu0 0
    %129 = vmatpush2.bf16.msra.mxu0 0
    %130 = vmatprep.subr.bf16.mxu0 0
    %131 = vmatpush2.bf16.msra.mxu0 0
    %132 = vmatprep.subr.bf16.mxu0 0
    %133 = vmatpush2.bf16.msra.mxu0 0
    %134 = vmatprep.subr.bf16.mxu0 0
    %135 = vmatpush2.bf16.msra.mxu0 0
    %136 = vmatprep.subr.bf16.mxu0 0
    %137 = vmatpush2.bf16.msra.mxu0 0
    %138 = vmatprep.subr.bf16.mxu0 0
    %139 = vmatpush2.bf16.msra.mxu0 0
    %140 = vmatprep.mubr.bf16.mxu0 0
    %141 = vmatmul.mubr.bf16.gmra.mxu0 %v106
    %v142 = vpop.f32.mrf.mxu0
    %v143 = vadd.f32 %v85, %v142
    %v144 = vpop.f32.mrf.mxu0
    %v145 = vpop.f32.mrf.mxu0
    %v146 = vadd.f32 %v85, %v145
    %v147 = vpop.f32.mrf.mxu0
    %148 = vdwg.mxu0
    %v149 = vld [vmem:[%s2] sm:$0xf]
    %v150 = vld [vmem:[%s2 + $0x4] sm:$0xf]
    %v151 = vld [vmem:[%s2 + $0x8] sm:$0xf]
    %v152 = vld [vmem:[%s2 + $0xc] sm:$0xf]
    %v153 = vld [vmem:[%s2 + $0x10] sm:$0xf]
    %v154 = vld [vmem:[%s2 + $0x14] sm:$0xf]
    %v155 = vld [vmem:[%s2 + $0x18] sm:$0xf]
    %v156 = vld [vmem:[%s2 + $0x1c] sm:$0xf]
    %v157 = vld [vmem:[%s2 + $0x20] sm:$0xf]
    %v158 = vld [vmem:[%s2 + $0x24] sm:$0xf]
    %v159 = vld [vmem:[%s2 + $0x28] sm:$0xf]
    %v160 = vld [vmem:[%s2 + $0x2c] sm:$0xf]
    %v161 = vld [vmem:[%s4] sm:$0xf]
    %v162 = vld [vmem:[%s4 + $0x4] sm:$0xf]
    %v163 = vld [vmem:[%s4 + $0x8] sm:$0xf]
    %v164 = vld [vmem:[%s4 + $0xc] sm:$0xf]
    %v177 = vunpack.c.l.b16 %v149
    %v178 = vunpack.c.l.b16 %v150
    %v179 = vunpack.c.l.b16 %v151
    %v180 = vunpack.c.l.b16 %v152
    %v181 = vunpack.c.l.b16 %v153
    %v182 = vunpack.c.l.b16 %v154
    %v183 = vunpack.c.l.b16 %v155
    %v184 = vunpack.c.l.b16 %v156
    %v185 = vunpack.c.l.b16 %v157
    %v186 = vunpack.c.l.b16 %v158
    %v187 = vunpack.c.l.b16 %v159
    %v188 = vunpack.c.l.b16 %v160
    %v189 = vpack.c.b16 %v178, %v177
    %v190 = vpack.c.b16 %v180, %v179
    %v191 = vpack.c.b16 %v182, %v181
    %v192 = vpack.c.b16 %v184, %v183
    %v193 = vpack.c.b16 %v186, %v185
    %v194 = vpack.c.b16 %v188, %v187
    %v199 = vunpack.c.l.b16 %v161
    %v200 = vunpack.c.l.b16 %v162
    %v201 = vunpack.c.l.b16 %v163
    %v202 = vunpack.c.l.b16 %v164
    %v203 = vpack.c.b16 %v200, %v199
    %v204 = vpack.c.b16 %v202, %v201
    %v208 = vsel %vm104, %v189, 0
    %v211 = vsel %vm104, %v190, 0
    %v214 = vsel %vm104, %v191, 0
    %v217 = vsel %vm104, %v192, 0
    %v220 = vsel %vm104, %v193, 0
    %v223 = vsel %vm104, %v194, 0
    %225 = vmatprep.subr.bf16.mxu0 0
    %226 = vmatpush1.bf16.msra.mxu0 0
    %227 = vmatprep.subr.bf16.mxu0 0
    %228 = vmatpush1.bf16.msra.mxu0 0
    %229 = vmatprep.subr.bf16.mxu0 0
    %230 = vmatpush1.bf16.msra.mxu0 0
    %231 = vmatprep.subr.bf16.mxu0 0
    %232 = vmatpush1.bf16.msra.mxu0 0
    %233 = vmatprep.subr.bf16.mxu0 0
    %234 = vmatpush1.bf16.msra.mxu0 0
    %235 = vmatprep.subr.bf16.mxu0 0
    %236 = vmatpush1.bf16.msra.mxu0 0
    %237 = vmatprep.subr.bf16.mxu0 0
    %238 = vmatpush1.bf16.msra.mxu0 %v204
    %239 = vmatprep.subr.bf16.mxu0 0
    %240 = vmatpush1.bf16.msra.mxu0 %v203
    %241 = vmatprep.subr.bf16.mxu0 0
    %242 = vmatpush2.bf16.msra.mxu0 0
    %243 = vmatprep.subr.bf16.mxu0 0
    %244 = vmatpush2.bf16.msra.mxu0 0
    %245 = vmatprep.subr.bf16.mxu0 0
    %246 = vmatpush2.bf16.msra.mxu0 0
    %247 = vmatprep.subr.bf16.mxu0 0
    %248 = vmatpush2.bf16.msra.mxu0 0
    %249 = vmatprep.subr.bf16.mxu0 0
    %250 = vmatpush2.bf16.msra.mxu0 0
    %251 = vmatprep.subr.bf16.mxu0 0
    %252 = vmatpush2.bf16.msra.mxu0 0
    %253 = vmatprep.subr.bf16.mxu0 0
    %254 = vmatpush2.bf16.msra.mxu0 0
    %255 = vmatprep.subr.bf16.mxu0 0
    %256 = vmatpush2.bf16.msra.mxu0 0
    %257 = vmatprep.mubr.bf16.mxu0 0
    %258 = vmatmul.mubr.bf16.gmra.mxu0 %v208
    %v259 = vpop.f32.mrf.mxu0
    %v260 = vadd.f32 0.0, %v259
    %v261 = vpop.f32.mrf.mxu0
    %v262 = vpop.f32.mrf.mxu0
    %v263 = vadd.f32 0.0, %v262
    %v264 = vpop.f32.mrf.mxu0
    %265 = vmatprep.mubr.bf16.mxu0 0
    %266 = vmatmul.mubr.bf16.gmra.mxu0 %v211
    %v267 = vpop.f32.mrf.mxu0
    %v268 = vadd.f32 0.0, %v267
    %v269 = vpop.f32.mrf.mxu0
    %v270 = vpop.f32.mrf.mxu0
    %v271 = vadd.f32 0.0, %v270
    %v272 = vpop.f32.mrf.mxu0
    %273 = vmatprep.mubr.bf16.mxu0 0
    %274 = vmatmul.mubr.bf16.gmra.mxu0 %v214
    %v275 = vpop.f32.mrf.mxu0
    %v276 = vadd.f32 0.0, %v275
    %v277 = vpop.f32.mrf.mxu0
    %v278 = vpop.f32.mrf.mxu0
    %v279 = vadd.f32 0.0, %v278
    %v280 = vpop.f32.mrf.mxu0
    %281 = vmatprep.mubr.bf16.mxu0 0
    %282 = vmatmul.mubr.bf16.gmra.mxu0 %v217
    %v283 = vpop.f32.mrf.mxu0
    %v284 = vadd.f32 0.0, %v283
    %v285 = vpop.f32.mrf.mxu0
    %v286 = vpop.f32.mrf.mxu0
    %v287 = vadd.f32 0.0, %v286
    %v288 = vpop.f32.mrf.mxu0
    %289 = vmatprep.mubr.bf16.mxu0 0
    %290 = vmatmul.mubr.bf16.gmra.mxu0 %v220
    %v291 = vpop.f32.mrf.mxu0
    %v292 = vadd.f32 0.0, %v291
    %v293 = vpop.f32.mrf.mxu0
    %v294 = vpop.f32.mrf.mxu0
    %v295 = vadd.f32 0.0, %v294
    %v296 = vpop.f32.mrf.mxu0
    %297 = vmatprep.mubr.bf16.mxu0 0
    %298 = vmatmul.mubr.bf16.gmra.mxu0 %v223
    %v299 = vpop.f32.mrf.mxu0
    %v300 = vadd.f32 0.0, %v299
    %v301 = vpop.f32.mrf.mxu0
    %v302 = vpop.f32.mrf.mxu0
    %v303 = vadd.f32 0.0, %v302
    %v304 = vpop.f32.mrf.mxu0
    %305 = vdwg.mxu0
    %v306 = vadd.f32 %v260, %v143
    %v307 = vadd.f32 %v263, %v143
    %v308 = vadd.f32 %v268, %v143
    %v309 = vadd.f32 %v271, %v146
    %v310 = vadd.f32 %v276, %v146
    %v311 = vadd.f32 %v279, %v146
    %v312 = vadd.f32 %v284, %v143
    %v313 = vadd.f32 %v287, %v143
    %v314 = vadd.f32 %v292, %v143
    %v315 = vadd.f32 %v295, %v146
    %v316 = vadd.f32 %v300, %v146
    %v317 = vadd.f32 %v303, %v146
    %v318 = vmax.f32 %v306, 0.0
    %v319 = vmax.f32 %v307, 0.0
    %v320 = vmax.f32 %v308, 0.0
    %v321 = vmax.f32 %v309, 0.0
    %v322 = vmax.f32 %v310, 0.0
    %v323 = vmax.f32 %v311, 0.0
    %v324 = vmax.f32 %v312, 0.0
    %v325 = vmax.f32 %v313, 0.0
    %v326 = vmax.f32 %v314, 0.0
    %v327 = vmax.f32 %v315, 0.0
    %v328 = vmax.f32 %v316, 0.0
    %v329 = vmax.f32 %v317, 0.0
    %v330 = vsel %vm104, %v318, 0.0
    %v331 = vsel %vm104, %v319, 0.0
    %v332 = vadd.f32 %v330, %v331
    %v333 = vsel %vm104, %v320, 0.0
    %v334 = vadd.f32 %v332, %v333
    %v335 = vsel %vm104, %v321, 0.0
    %v336 = vsel %vm104, %v322, 0.0
    %v337 = vadd.f32 %v335, %v336
    %v338 = vsel %vm104, %v323, 0.0
    %v339 = vadd.f32 %v337, %v338
    %v340 = vsel %vm104, %v324, 0.0
    %v341 = vsel %vm104, %v325, 0.0
    %v342 = vadd.f32 %v340, %v341
    %v343 = vsel %vm104, %v326, 0.0
    %v344 = vadd.f32 %v342, %v343
    %v345 = vsel %vm104, %v327, 0.0
    %v346 = vsel %vm104, %v328, 0.0
    %v347 = vadd.f32 %v345, %v346
    %v348 = vsel %vm104, %v329, 0.0
    %v349 = vadd.f32 %v347, %v348
    %v350 = vmul.f32 %v334, 0.33333334
    %v351 = vmul.f32 %v339, 0.33333334
    %v352 = vmul.f32 %v344, 0.33333334
    %v353 = vmul.f32 %v349, 0.33333334
    %v354 = vpack.c.bf16 %v351, %v350
    %v355 = vpack.c.bf16 %v353, %v352
    %v356 = vld [vmem:[#allocation4] sm:$0xf]
    %v357 = vld [vmem:[#allocation4 + $0x4] sm:$0xf]
    %v358 = vld [vmem:[#allocation4 + $0x8] sm:$0xf]
    %v359 = vld [vmem:[#allocation4 + $0xc] sm:$0xf]
    %v360 = vld [vmem:[%s7] sm:$0x1]
    %v362 = vlaneseq
    %v363 = vshrl.u32 %v362, 7
    %v364 = vsub.s32 0, %v363
    %v365 = vrot.slane %v360, %v364
    %v371 = vunpack.c.l.b16 %v356
    %v372 = vunpack.c.l.b16 %v357
    %v373 = vunpack.c.l.b16 %v358
    %v374 = vunpack.c.l.b16 %v359
    %v375 = vpack.c.b16 %v372, %v371
    %v376 = vpack.c.b16 %v374, %v373
    %v380 = vsel %vm104, %v354, 0
    %v383 = vsel %vm104, %v355, 0
    %385 = vmatprep.subr.bf16.mxu0 0
    %386 = vmatpush1.bf16.msra.mxu0 0
    %387 = vmatprep.subr.bf16.mxu0 0
    %388 = vmatpush1.bf16.msra.mxu0 0
    %389 = vmatprep.subr.bf16.mxu0 0
    %390 = vmatpush1.bf16.msra.mxu0 0
    %391 = vmatprep.subr.bf16.mxu0 0
    %392 = vmatpush1.bf16.msra.mxu0 0
    %393 = vmatprep.subr.bf16.mxu0 0
    %394 = vmatpush1.bf16.msra.mxu0 0
    %395 = vmatprep.subr.bf16.mxu0 0
    %396 = vmatpush1.bf16.msra.mxu0 0
    %397 = vmatprep.subr.bf16.mxu0 0
    %398 = vmatpush1.bf16.msra.mxu0 %v376
    %399 = vmatprep.subr.bf16.mxu0 0
    %400 = vmatpush1.bf16.msra.mxu0 %v375
    %401 = vmatprep.subr.bf16.mxu0 0
    %402 = vmatpush2.bf16.msra.mxu0 0
    %403 = vmatprep.subr.bf16.mxu0 0
    %404 = vmatpush2.bf16.msra.mxu0 0
    %405 = vmatprep.subr.bf16.mxu0 0
    %406 = vmatpush2.bf16.msra.mxu0 0
    %407 = vmatprep.subr.bf16.mxu0 0
    %408 = vmatpush2.bf16.msra.mxu0 0
    %409 = vmatprep.subr.bf16.mxu0 0
    %410 = vmatpush2.bf16.msra.mxu0 0
    %411 = vmatprep.subr.bf16.mxu0 0
    %412 = vmatpush2.bf16.msra.mxu0 0
    %413 = vmatprep.subr.bf16.mxu0 0
    %414 = vmatpush2.bf16.msra.mxu0 0
    %415 = vmatprep.subr.bf16.mxu0 0
    %416 = vmatpush2.bf16.msra.mxu0 0
    %417 = vmatprep.mubr.bf16.mxu0 0
    %418 = vmatmul.mubr.bf16.gmra.mxu0 %v380
    %v419 = vpop.f32.mrf.mxu0
    %v420 = vadd.f32 %v365, %v419
    %v421 = vpop.f32.mrf.mxu0
    %v422 = vpop.f32.mrf.mxu0
    %v423 = vadd.f32 %v365, %v422
    %v424 = vpop.f32.mrf.mxu0
    %425 = vmatprep.mubr.bf16.mxu0 0
    %426 = vmatmul.mubr.bf16.gmra.mxu0 %v383
    %v427 = vpop.f32.mrf.mxu0
    %v428 = vadd.f32 %v365, %v427
    %v429 = vpop.f32.mrf.mxu0
    %v430 = vpop.f32.mrf.mxu0
    %v431 = vadd.f32 %v365, %v430
    %v432 = vpop.f32.mrf.mxu0
    %433 = vdwg.mxu0
    %v434 = vmax.f32 %v420, 0.0
    %v435 = vmax.f32 %v423, 0.0
    %v436 = vmax.f32 %v428, 0.0
    %v437 = vmax.f32 %v431, 0.0
    %v438 = vpack.c.bf16 %v434, %v434
    %v439 = vpack.c.bf16 %v435, %v435
    %v440 = vpack.c.bf16 %v436, %v436
    %v441 = vpack.c.bf16 %v437, %v437
    %v442 = vld [vmem:[#allocation2] sm:$0xf]
    %v443 = vld [vmem:[%s8] sm:$0xf]
    %v444 = vld [vmem:[%s8 + $0x4] sm:$0xf]
    %v445 = vld [vmem:[%s8 + $0x8] sm:$0xf]
    %v446 = vld [vmem:[%s8 + $0xc] sm:$0xf]
    %v447 = vld [vmem:[%s9] sm:$0xf]
    %v448 = vld [vmem:[%s9 + $0x4] sm:$0xf]
    %v449 = vld [vmem:[%s9 + $0x8] sm:$0xf]
    %v450 = vld [vmem:[%s9 + $0xc] sm:$0xf]
    %v455 = vunpack.c.l.b16 %v447
    %v456 = vunpack.c.l.b16 %v448
    %v457 = vunpack.c.l.b16 %v449
    %v458 = vunpack.c.l.b16 %v450
    %v459 = vpack.c.b16 %v456, %v455
    %v460 = vpack.c.b16 %v458, %v457
    %v464 = vsel %vm104, %v438, 0
    %466 = vmatprep.subr.bf16.mxu0 0
    %467 = vmatpush1.bf16.msra.mxu0 0
    %468 = vmatprep.subr.bf16.mxu0 0
    %469 = vmatpush1.bf16.msra.mxu0 0
    %470 = vmatprep.subr.bf16.mxu0 0
    %471 = vmatpush1.bf16.msra.mxu0 0
    %472 = vmatprep.subr.bf16.mxu0 0
    %473 = vmatpush1.bf16.msra.mxu0 0
    %474 = vmatprep.subr.bf16.mxu0 0
    %475 = vmatpush1.bf16.msra.mxu0 0
    %476 = vmatprep.subr.bf16.mxu0 0
    %477 = vmatpush1.bf16.msra.mxu0 0
    %478 = vmatprep.subr.bf16.mxu0 0
    %479 = vmatpush1.bf16.msra.mxu0 %v460
    %480 = vmatprep.subr.bf16.mxu0 0
    %481 = vmatpush1.bf16.msra.mxu0 %v459
    %482 = vmatprep.subr.bf16.mxu0 0
    %483 = vmatpush2.bf16.msra.mxu0 0
    %484 = vmatprep.subr.bf16.mxu0 0
    %485 = vmatpush2.bf16.msra.mxu0 0
    %486 = vmatprep.subr.bf16.mxu0 0
    %487 = vmatpush2.bf16.msra.mxu0 0
    %488 = vmatprep.subr.bf16.mxu0 0
    %489 = vmatpush2.bf16.msra.mxu0 0
    %490 = vmatprep.subr.bf16.mxu0 0
    %491 = vmatpush2.bf16.msra.mxu0 0
    %492 = vmatprep.subr.bf16.mxu0 0
    %493 = vmatpush2.bf16.msra.mxu0 0
    %494 = vmatprep.subr.bf16.mxu0 0
    %495 = vmatpush2.bf16.msra.mxu0 0
    %496 = vmatprep.subr.bf16.mxu0 0
    %497 = vmatpush2.bf16.msra.mxu0 0
    %498 = vmatprep.mubr.bf16.mxu0 0
    %499 = vmatmul.mubr.bf16.gmra.mxu0 %v464
    %v500 = vpop.f32.mrf.mxu0
    %v501 = vadd.f32 0.0, %v500
    %v502 = vpop.f32.mrf.mxu0
    %v503 = vpop.f32.mrf.mxu0
    %v504 = vpop.f32.mrf.mxu0
    %505 = vdwg.mxu0
    %v510 = vunpack.c.l.b16 %v443
    %v511 = vunpack.c.l.b16 %v444
    %v512 = vunpack.c.l.b16 %v445
    %v513 = vunpack.c.l.b16 %v446
    %v514 = vpack.c.b16 %v511, %v510
    %v515 = vpack.c.b16 %v513, %v512
    %v519 = vsel %vm104, %v442, 0
    %521 = vmatprep.subr.bf16.mxu0 0
    %522 = vmatpush1.bf16.msra.mxu0 0
    %523 = vmatprep.subr.bf16.mxu0 0
    %524 = vmatpush1.bf16.msra.mxu0 0
    %525 = vmatprep.subr.bf16.mxu0 0
    %526 = vmatpush1.bf16.msra.mxu0 0
    %527 = vmatprep.subr.bf16.mxu0 0
    %528 = vmatpush1.bf16.msra.mxu0 0
    %529 = vmatprep.subr.bf16.mxu0 0
    %530 = vmatpush1.bf16.msra.mxu0 0
    %531 = vmatprep.subr.bf16.mxu0 0
    %532 = vmatpush1.bf16.msra.mxu0 0
    %533 = vmatprep.subr.bf16.mxu0 0
    %534 = vmatpush1.bf16.msra.mxu0 %v515
    %535 = vmatprep.subr.bf16.mxu0 0
    %536 = vmatpush1.bf16.msra.mxu0 %v514
    %537 = vmatprep.subr.bf16.mxu0 0
    %538 = vmatpush2.bf16.msra.mxu0 0
    %539 = vmatprep.subr.bf16.mxu0 0
    %540 = vmatpush2.bf16.msra.mxu0 0
    %541 = vmatprep.subr.bf16.mxu0 0
    %542 = vmatpush2.bf16.msra.mxu0 0
    %543 = vmatprep.subr.bf16.mxu0 0
    %544 = vmatpush2.bf16.msra.mxu0 0
    %545 = vmatprep.subr.bf16.mxu0 0
    %546 = vmatpush2.bf16.msra.mxu0 0
    %547 = vmatprep.subr.bf16.mxu0 0
    %548 = vmatpush2.bf16.msra.mxu0 0
    %549 = vmatprep.subr.bf16.mxu0 0
    %550 = vmatpush2.bf16.msra.mxu0 0
    %551 = vmatprep.subr.bf16.mxu0 0
    %552 = vmatpush2.bf16.msra.mxu0 0
    %553 = vmatprep.mubr.bf16.mxu0 0
    %554 = vmatmul.mubr.bf16.gmra.mxu0 %v519
    %v555 = vpop.f32.mrf.mxu0
    %v556 = vadd.f32 %v501, %v555
    %v557 = vpop.f32.mrf.mxu0
    %v558 = vpop.f32.mrf.mxu0
    %v559 = vpop.f32.mrf.mxu0
    %560 = vdwg.mxu0
    %v561 = vld [vmem:[%s10] sm:$0xf]
    %v562 = vld [vmem:[%s10 + $0x4] sm:$0xf]
    %v563 = vld [vmem:[%s10 + $0x8] sm:$0xf]
    %v564 = vld [vmem:[%s10 + $0xc] sm:$0xf]
    %v569 = vunpack.c.l.b16 %v561
    %v570 = vunpack.c.l.b16 %v562
    %v571 = vunpack.c.l.b16 %v563
    %v572 = vunpack.c.l.b16 %v564
    %v573 = vpack.c.b16 %v570, %v569
    %v574 = vpack.c.b16 %v572, %v571
    %v578 = vsel %vm104, %v439, 0
    %580 = vmatprep.subr.bf16.mxu0 0
    %581 = vmatpush1.bf16.msra.mxu0 0
    %582 = vmatprep.subr.bf16.mxu0 0
    %583 = vmatpush1.bf16.msra.mxu0 0
    %584 = vmatprep.subr.bf16.mxu0 0
    %585 = vmatpush1.bf16.msra.mxu0 0
    %586 = vmatprep.subr.bf16.mxu0 0
    %587 = vmatpush1.bf16.msra.mxu0 0
    %588 = vmatprep.subr.bf16.mxu0 0
    %589 = vmatpush1.bf16.msra.mxu0 0
    %590 = vmatprep.subr.bf16.mxu0 0
    %591 = vmatpush1.bf16.msra.mxu0 0
    %592 = vmatprep.subr.bf16.mxu0 0
    %593 = vmatpush1.bf16.msra.mxu0 %v574
    %594 = vmatprep.subr.bf16.mxu0 0
    %595 = vmatpush1.bf16.msra.mxu0 %v573
    %596 = vmatprep.subr.bf16.mxu0 0
    %597 = vmatpush2.bf16.msra.mxu0 0
    %598 = vmatprep.subr.bf16.mxu0 0
    %599 = vmatpush2.bf16.msra.mxu0 0
    %600 = vmatprep.subr.bf16.mxu0 0
    %601 = vmatpush2.bf16.msra.mxu0 0
    %602 = vmatprep.subr.bf16.mxu0 0
    %603 = vmatpush2.bf16.msra.mxu0 0
    %604 = vmatprep.subr.bf16.mxu0 0
    %605 = vmatpush2.bf16.msra.mxu0 0
    %606 = vmatprep.subr.bf16.mxu0 0
    %607 = vmatpush2.bf16.msra.mxu0 0
    %608 = vmatprep.subr.bf16.mxu0 0
    %609 = vmatpush2.bf16.msra.mxu0 0
    %610 = vmatprep.subr.bf16.mxu0 0
    %611 = vmatpush2.bf16.msra.mxu0 0
    %612 = vmatprep.mubr.bf16.mxu0 0
    %613 = vmatmul.mubr.bf16.gmra.mxu0 %v578
    %v614 = vpop.f32.mrf.mxu0
    %v615 = vadd.f32 0.0, %v614
    %v616 = vpop.f32.mrf.mxu0
    %v617 = vpop.f32.mrf.mxu0
    %v618 = vpop.f32.mrf.mxu0
    %619 = vdwg.mxu0
    %v620 = vadd.f32 %v556, %v615
    %v621 = vld [vmem:[%s11] sm:$0xf]
    %v622 = vld [vmem:[%s11 + $0x4] sm:$0xf]
    %v623 = vld [vmem:[%s11 + $0x8] sm:$0xf]
    %v624 = vld [vmem:[%s11 + $0xc] sm:$0xf]
    %v629 = vunpack.c.l.b16 %v621
    %v630 = vunpack.c.l.b16 %v622
    %v631 = vunpack.c.l.b16 %v623
    %v632 = vunpack.c.l.b16 %v624
    %v633 = vpack.c.b16 %v630, %v629
    %v634 = vpack.c.b16 %v632, %v631
    %v638 = vsel %vm104, %v440, 0
    %640 = vmatprep.subr.bf16.mxu0 0
    %641 = vmatpush1.bf16.msra.mxu0 0
    %642 = vmatprep.subr.bf16.mxu0 0
    %643 = vmatpush1.bf16.msra.mxu0 0
    %644 = vmatprep.subr.bf16.mxu0 0
    %645 = vmatpush1.bf16.msra.mxu0 0
    %646 = vmatprep.subr.bf16.mxu0 0
    %647 = vmatpush1.bf16.msra.mxu0 0
    %648 = vmatprep.subr.bf16.mxu0 0
    %649 = vmatpush1.bf16.msra.mxu0 0
    %650 = vmatprep.subr.bf16.mxu0 0
    %651 = vmatpush1.bf16.msra.mxu0 0
    %652 = vmatprep.subr.bf16.mxu0 0
    %653 = vmatpush1.bf16.msra.mxu0 %v634
    %654 = vmatprep.subr.bf16.mxu0 0
    %655 = vmatpush1.bf16.msra.mxu0 %v633
    %656 = vmatprep.subr.bf16.mxu0 0
    %657 = vmatpush2.bf16.msra.mxu0 0
    %658 = vmatprep.subr.bf16.mxu0 0
    %659 = vmatpush2.bf16.msra.mxu0 0
    %660 = vmatprep.subr.bf16.mxu0 0
    %661 = vmatpush2.bf16.msra.mxu0 0
    %662 = vmatprep.subr.bf16.mxu0 0
    %663 = vmatpush2.bf16.msra.mxu0 0
    %664 = vmatprep.subr.bf16.mxu0 0
    %665 = vmatpush2.bf16.msra.mxu0 0
    %666 = vmatprep.subr.bf16.mxu0 0
    %667 = vmatpush2.bf16.msra.mxu0 0
    %668 = vmatprep.subr.bf16.mxu0 0
    %669 = vmatpush2.bf16.msra.mxu0 0
    %670 = vmatprep.subr.bf16.mxu0 0
    %671 = vmatpush2.bf16.msra.mxu0 0
    %672 = vmatprep.mubr.bf16.mxu0 0
    %673 = vmatmul.mubr.bf16.gmra.mxu0 %v638
    %v674 = vpop.f32.mrf.mxu0
    %v675 = vadd.f32 0.0, %v674
    %v676 = vpop.f32.mrf.mxu0
    %v677 = vpop.f32.mrf.mxu0
    %v678 = vpop.f32.mrf.mxu0
    %679 = vdwg.mxu0
    %v680 = vadd.f32 %v620, %v675
    %v681 = vld [vmem:[%s12] sm:$0xf]
    %v682 = vld [vmem:[%s12 + $0x4] sm:$0xf]
    %v683 = vld [vmem:[%s12 + $0x8] sm:$0xf]
    %v684 = vld [vmem:[%s12 + $0xc] sm:$0xf]
    %v689 = vunpack.c.l.b16 %v681
    %v690 = vunpack.c.l.b16 %v682
    %v691 = vunpack.c.l.b16 %v683
    %v692 = vunpack.c.l.b16 %v684
    %v693 = vpack.c.b16 %v690, %v689
    %v694 = vpack.c.b16 %v692, %v691
    %v698 = vsel %vm104, %v441, 0
    %700 = vmatprep.subr.bf16.mxu0 0
    %701 = vmatpush1.bf16.msra.mxu0 0
    %702 = vmatprep.subr.bf16.mxu0 0
    %703 = vmatpush1.bf16.msra.mxu0 0
    %704 = vmatprep.subr.bf16.mxu0 0
    %705 = vmatpush1.bf16.msra.mxu0 0
    %706 = vmatprep.subr.bf16.mxu0 0
    %707 = vmatpush1.bf16.msra.mxu0 0
    %708 = vmatprep.subr.bf16.mxu0 0
    %709 = vmatpush1.bf16.msra.mxu0 0
    %710 = vmatprep.subr.bf16.mxu0 0
    %711 = vmatpush1.bf16.msra.mxu0 0
    %712 = vmatprep.subr.bf16.mxu0 0
    %713 = vmatpush1.bf16.msra.mxu0 %v694
    %714 = vmatprep.subr.bf16.mxu0 0
    %715 = vmatpush1.bf16.msra.mxu0 %v693
    %716 = vmatprep.subr.bf16.mxu0 0
    %717 = vmatpush2.bf16.msra.mxu0 0
    %718 = vmatprep.subr.bf16.mxu0 0
    %719 = vmatpush2.bf16.msra.mxu0 0
    %720 = vmatprep.subr.bf16.mxu0 0
    %721 = vmatpush2.bf16.msra.mxu0 0
    %722 = vmatprep.subr.bf16.mxu0 0
    %723 = vmatpush2.bf16.msra.mxu0 0
    %724 = vmatprep.subr.bf16.mxu0 0
    %725 = vmatpush2.bf16.msra.mxu0 0
    %726 = vmatprep.subr.bf16.mxu0 0
    %727 = vmatpush2.bf16.msra.mxu0 0
    %728 = vmatprep.subr.bf16.mxu0 0
    %729 = vmatpush2.bf16.msra.mxu0 0
    %730 = vmatprep.subr.bf16.mxu0 0
    %731 = vmatpush2.bf16.msra.mxu0 0
    %732 = vmatprep.mubr.bf16.mxu0 0
    %733 = vmatmul.mubr.bf16.gmra.mxu0 %v698
    %v734 = vpop.f32.mrf.mxu0
    %v735 = vadd.f32 0.0, %v734
    %v736 = vpop.f32.mrf.mxu0
    %v737 = vpop.f32.mrf.mxu0
    %v738 = vpop.f32.mrf.mxu0
    %739 = vdwg.mxu0
    %v740 = vadd.f32 %v680, %v735
    %v741 = vld [vmem:[%s13] sm:$0x1]
    %v743 = vlaneseq
    %v744 = vshrl.u32 %v743, 7
    %v745 = vsub.s32 0, %v744
    %v746 = vrot.slane %v741, %v745
    %v748 = vadd.f32 %v740, %v746
    %vm749 = vcmask 15360
    %750 = vst.msk [vmem:[%s14] sm:$0xff] %vm749, %v748
    // Predicated region
    $region66: #{tpu_custom_call.1} parent=1 // pred_check
      _
    $region67: #{tpu_custom_call.1} parent=1 // pred_check_branch
      %752 = sbr.rel (0) target = $region69
    $region68: #{tpu_custom_call.1} parent=1 // pred_region
      _
    $region69: #{tpu_custom_call.1} parent=1 // pred_fallthru
      _
    // Predicated region
    $region70: #{tpu_custom_call.1} parent=1 // pred_check
      _
    $region71: #{tpu_custom_call.1} parent=1 // pred_check_branch
      %754 = sbr.rel (0) target = $region73
    $region72: #{tpu_custom_call.1} parent=1 // pred_region
      _
    $region73: #{tpu_custom_call.1} parent=1 // pred_fallthru
      _
    %755 = vsyncpa [#allocation3], 1
    %756 = vsyncpa [#allocation5], 1

</llo_original>
